<compile_context>
chip_gen: v5e
topology: v5e:2x2
jax: 0.10.0
libtpu: 0.0.40
codegen_flags: <defaults>
</compile_context>

<pallas_src>
import math

import jax
import jax.numpy as jnp
from jax.experimental import pallas as pl
from jax.experimental.pallas import tpu as pltpu


def _round_up(n: int, m: int) -> int:
    return ((n + m - 1) // m) * m


# ---------------------------------------------------------------------------
# Kernel: one batch tile -> hidden = tanh(x @ W1 + b1) -> fused-head slab.
# ---------------------------------------------------------------------------
def actor_kernel(x_ref, w1_ref, b1_ref, wh_ref, bh_ref, out_ref):
    # MXU matmuls take bf16 inputs, accumulate in f32; tanh runs on the EUP.
    x_bf = x_ref[...].astype(jnp.bfloat16)
    h = jnp.tanh(
        jnp.dot(x_bf, w1_ref[...], preferred_element_type=jnp.float32)
        + b1_ref[...]
    )
    # fused heads: [TB, C_pad] = h @ W_heads + b_heads   (mu | logvar | zero-pad)
    out_ref[...] = (
        jnp.dot(h.astype(jnp.bfloat16), wh_ref[...],
                preferred_element_type=jnp.float32)
        + bh_ref[...]
    ).astype(out_ref.dtype)


# ---------------------------------------------------------------------------
# Wrapper
# ---------------------------------------------------------------------------
def actor_forward(x, params):
    """x: [B, input_dim] float32. params: dict from init_actor_params."""
    B, d_in = x.shape
    out_dim = params["out_dim"]

    w1 = params["w1_p"]        # [d_in,  H_pad]  bf16
    b1 = params["b1_p"]        # [1,     H_pad]  f32
    wh = params["w_heads_p"]   # [H_pad, C_pad]  bf16
    bh = params["b_heads_p"]   # [1,     C_pad]  f32
    h_pad = w1.shape[1]
    c_pad = wh.shape[1]

    # Batch tile: multiple of 8 sublanes, up to 1024 rows. For B >= 16 force at
    # least 2 grid steps so the "parallel" axis can shard across both v7x TCs.
    cap = 1024
    if B >= 16:
        n_tiles = max(2, pl.cdiv(B, cap))
    else:
        n_tiles = 1
    tb = min(cap, _round_up(pl.cdiv(B, n_tiles), 8))
    grid = (pl.cdiv(B, tb),)   # ragged last tile handled by Pallas masking

    # Constant-index-map operands: single-buffered (no point double-buffering).
    resident = pl.Buffered(1)

    flops = 2 * B * (d_in * h_pad + h_pad * c_pad)
    bytes_accessed = (B * d_in * 4            # x read (f32)
                      + w1.size * 2 + wh.size * 2   # bf16 weights
                      + b1.size * 4 + bh.size * 4   # f32 biases
                      + B * c_pad * 4)        # output slab write (f32)

    out = pl.pallas_call(
        actor_kernel,
        out_shape=jax.ShapeDtypeStruct((B, c_pad), jnp.float32),
        grid=grid,
        in_specs=[
            pl.BlockSpec((tb, d_in), lambda i: (i, 0)),                 # x: batch-tiled
            pl.BlockSpec((d_in, h_pad), lambda i: (0, 0), pipeline_mode=resident),
            pl.BlockSpec((1, h_pad), lambda i: (0, 0), pipeline_mode=resident),
            pl.BlockSpec((h_pad, c_pad), lambda i: (0, 0), pipeline_mode=resident),
            pl.BlockSpec((1, c_pad), lambda i: (0, 0), pipeline_mode=resident),
        ],
        out_specs=pl.BlockSpec((tb, c_pad), lambda i: (i, 0)),
        compiler_params=pltpu.CompilerParams(
            dimension_semantics=("parallel",),   # megacore on v7x; no-op otherwise
            vmem_limit_bytes=32 * 1024 * 1024,   # safe on all gens incl. v7x
        ),
        cost_estimate=pl.CostEstimate(
            flops=flops,
            transcendentals=B * h_pad,
            bytes_accessed=bytes_accessed,
        ),
    )(x, w1, b1, wh, bh)

    # Column slices only (no row slice / batch padding). Under jit these fuse
    # into the consumers; the slab itself stays lane-dense in the kernel.
    mu = out[:, :out_dim]
    logvar = out[:, out_dim:2 * out_dim]
    return mu, logvar


# ---------------------------------------------------------------------------
# Param init: mirrors nn.Linear defaults + the __init__ scaling
# (mu/logvar weights *= 0.1, biases *= 0.0), then fuses + zero-pads the heads.
# Weights stored bf16 (MXU-native); biases stay f32 (added to f32 accumulator).
# ---------------------------------------------------------------------------
def init_actor_params(key, input_dim, hidden_dim, output_dim):
    k = jax.random.split(key, 6)

    def linear_init(kw, kb, fan_in, fan_out):
        bound = 1.0 / math.sqrt(fan_in)
        w = jax.random.uniform(kw, (fan_in, fan_out), jnp.float32, -bound, bound)
        b = jax.random.uniform(kb, (1, fan_out), jnp.float32, -bound, bound)
        return w, b

    w1, b1 = linear_init(k[0], k[1], input_dim, hidden_dim)
    w_mu, b_mu = linear_init(k[2], k[3], hidden_dim, output_dim)
    w_lv, b_lv = linear_init(k[4], k[5], hidden_dim, output_dim)
    w_mu, b_mu = w_mu * 0.1, b_mu * 0.0
    w_lv, b_lv = w_lv * 0.1, b_lv * 0.0

    # Pad hidden and combined-head widths to lane multiples (zeros -> no-op math).
    h_pad = _round_up(hidden_dim, 128)
    c_pad = _round_up(2 * output_dim, 128)

    w1_p = jnp.zeros((input_dim, h_pad), jnp.float32).at[:, :hidden_dim].set(w1)
    b1_p = jnp.zeros((1, h_pad), jnp.float32).at[:, :hidden_dim].set(b1)

    w_heads_p = jnp.zeros((h_pad, c_pad), jnp.float32)
    w_heads_p = w_heads_p.at[:hidden_dim, :output_dim].set(w_mu)
    w_heads_p = w_heads_p.at[:hidden_dim, output_dim:2 * output_dim].set(w_lv)

    b_heads_p = jnp.zeros((1, c_pad), jnp.float32)
    b_heads_p = b_heads_p.at[:, :output_dim].set(b_mu)
    b_heads_p = b_heads_p.at[:, output_dim:2 * output_dim].set(b_lv)

    return {
        # padded / fused params used by the kernel (weights bf16, biases f32)
        "w1_p": w1_p.astype(jnp.bfloat16), "b1_p": b1_p,
        "w_heads_p": w_heads_p.astype(jnp.bfloat16), "b_heads_p": b_heads_p,
        "out_dim": output_dim,
        # unpadded f32 params for the pure-JAX reference
        "w1": w1, "b1": b1,
        "w_mu": w_mu, "b_mu": b_mu,
        "w_lv": w_lv, "b_lv": b_lv,
    }


def actor_forward_ref(x, p):
    h = jnp.tanh(x @ p["w1"] + p["b1"])
    return h @ p["w_mu"] + p["b_mu"], h @ p["w_lv"] + p["b_lv"]


if __name__ == "__main__":
    input_dim, hidden_dim, output_dim = 16, 32, 8

    key = jax.random.PRNGKey(0)
    kx, kp, kx2 = jax.random.split(key, 3)
    params = init_actor_params(kp, input_dim, hidden_dim, output_dim)

    # Primary small-shape check (single tile).
    batch = 8
    x = jax.random.normal(kx, (batch, input_dim), jnp.float32)
    mu, logvar = actor_forward(x, params)
    jax.block_until_ready((mu, logvar))
    mu_ref, lv_ref = actor_forward_ref(x, params)
    assert mu.shape == (batch, output_dim) and logvar.shape == (batch, output_dim)
    # bf16 MXU inputs -> loosen tolerance vs the f32 reference.
    assert jnp.allclose(mu, mu_ref, atol=2e-2), "mu mismatch"
    assert jnp.allclose(logvar, lv_ref, atol=2e-2), "logvar mismatch"

    # Second check: batch not a multiple of the tile -> exercises the ragged
    # last grid step and the >=2-tile (megacore) path, with no batch padding.
    batch2 = 20
    x2 = jax.random.normal(kx2, (batch2, input_dim), jnp.float32)
    mu2, lv2 = actor_forward(x2, params)
    jax.block_until_ready((mu2, lv2))
    mu2_ref, lv2_ref = actor_forward_ref(x2, params)
    assert mu2.shape == (batch2, output_dim) and lv2.shape == (batch2, output_dim)
    assert jnp.allclose(mu2, mu2_ref, atol=2e-2), "mu mismatch (ragged batch)"
    assert jnp.allclose(lv2, lv2_ref, atol=2e-2), "logvar mismatch (ragged batch)"

    print("KERNEL_OK")
</pallas_src>

<mosaic_0001>
module attributes {stable_mosaic.version = 11 : i64} {
  func.func @actor_kernel(%arg0: i32, %arg1: memref<8x16xf32, #tpu.memory_space<vmem>>, %arg2: memref<16x128xbf16, #tpu.memory_space<vmem>>, %arg3: memref<1x128xf32, #tpu.memory_space<vmem>>, %arg4: memref<128x128xbf16, #tpu.memory_space<vmem>>, %arg5: memref<1x128xf32, #tpu.memory_space<vmem>>, %arg6: memref<8x128xf32, #tpu.memory_space<vmem>>) attributes {dimension_semantics = [#tpu.dimension_semantics<parallel>], iteration_bounds = array<i64: 1>, scalar_prefetch = 0 : i64, scratch_operands = 0 : i64, tpu.core_type = #tpu.core_type<tc>, window_params = [{transform_indices = @transform_0, window_bounds = array<i64: 8, 16>}, {pipeline_mode = #tpu.pipeline_mode<synchronous>, transform_indices = @transform_1, window_bounds = array<i64: 16, 128>}, {pipeline_mode = #tpu.pipeline_mode<synchronous>, transform_indices = @transform_2, window_bounds = array<i64: 1, 128>}, {pipeline_mode = #tpu.pipeline_mode<synchronous>, transform_indices = @transform_3, window_bounds = array<i64: 128, 128>}, {pipeline_mode = #tpu.pipeline_mode<synchronous>, transform_indices = @transform_4, window_bounds = array<i64: 1, 128>}, {transform_indices = @transform_5, window_bounds = array<i64: 8, 128>}]} {
    %c0 = arith.constant 0 : index
    %c0_0 = arith.constant 0 : index
    %0 = vector.load %arg1[%c0, %c0_0] : memref<8x16xf32, #tpu.memory_space<vmem>>, vector<8x16xf32>
    %1 = arith.truncf %0 : vector<8x16xf32> to vector<8x16xbf16>
    %c0_1 = arith.constant 0 : index
    %c0_2 = arith.constant 0 : index
    %2 = vector.load %arg2[%c0_1, %c0_2] : memref<16x128xbf16, #tpu.memory_space<vmem>>, vector<16x128xbf16>
    %cst = arith.constant dense<0.000000e+00> : vector<8x128xf32>
    %3 = tpu.matmul %1, %2, %cst {dimension_numbers = #tpu.dot_dimension_numbers<[1], [0], [0], [1], [0, 0, 1, 1], [], []>} : vector<8x16xbf16>, vector<16x128xbf16>, vector<8x128xf32> -> vector<8x128xf32>
    %c0_3 = arith.constant 0 : index
    %c0_4 = arith.constant 0 : index
    %4 = vector.load %arg3[%c0_3, %c0_4] : memref<1x128xf32, #tpu.memory_space<vmem>>, vector<1x128xf32>
    %5 = vector.broadcast %4 : vector<1x128xf32> to vector<8x128xf32>
    %6 = arith.addf %3, %5 : vector<8x128xf32>
    %7 = math.tanh %6 : vector<8x128xf32>
    %8 = arith.truncf %7 : vector<8x128xf32> to vector<8x128xbf16>
    %c0_5 = arith.constant 0 : index
    %c0_6 = arith.constant 0 : index
    %9 = vector.load %arg4[%c0_5, %c0_6] : memref<128x128xbf16, #tpu.memory_space<vmem>>, vector<128x128xbf16>
    %cst_7 = arith.constant dense<0.000000e+00> : vector<8x128xf32>
    %10 = tpu.matmul %8, %9, %cst_7 {dimension_numbers = #tpu.dot_dimension_numbers<[1], [0], [0], [1], [0, 0, 1, 1], [], []>} : vector<8x128xbf16>, vector<128x128xbf16>, vector<8x128xf32> -> vector<8x128xf32>
    %c0_8 = arith.constant 0 : index
    %c0_9 = arith.constant 0 : index
    %11 = vector.load %arg5[%c0_8, %c0_9] : memref<1x128xf32, #tpu.memory_space<vmem>>, vector<1x128xf32>
    %12 = vector.broadcast %11 : vector<1x128xf32> to vector<8x128xf32>
    %13 = arith.addf %10, %12 : vector<8x128xf32>
    %c0_10 = arith.constant 0 : index
    %c0_11 = arith.constant 0 : index
    %14 = vector.load %arg6[%c0_10, %c0_11] : memref<8x128xf32, #tpu.memory_space<vmem>>, vector<8x128xf32>
    tpu.vector_store %arg6[%c0_10, %c0_11], %13 {strides = array<i32>} : memref<8x128xf32, #tpu.memory_space<vmem>>, vector<8x128xf32>,
    return
  }
  func.func @transform_0(%arg0: i32) -> (i32, i32) {
    %c0_i32 = arith.constant 0 : i32
    %c0_i32_0 = arith.constant 0 : i32
    return %arg0, %c0_i32 : i32, i32
  }
  func.func @transform_1(%arg0: i32) -> (i32, i32) {
    %c0_i32 = arith.constant 0 : i32
    %c0_i32_0 = arith.constant 0 : i32
    %c0_i32_1 = arith.constant 0 : i32
    return %c0_i32, %c0_i32_0 : i32, i32
  }
  func.func @transform_2(%arg0: i32) -> (i32, i32) {
    %c0_i32 = arith.constant 0 : i32
    %c0_i32_0 = arith.constant 0 : i32
    %c0_i32_1 = arith.constant 0 : i32
    return %c0_i32, %c0_i32_0 : i32, i32
  }
  func.func @transform_3(%arg0: i32) -> (i32, i32) {
    %c0_i32 = arith.constant 0 : i32
    %c0_i32_0 = arith.constant 0 : i32
    %c0_i32_1 = arith.constant 0 : i32
    return %c0_i32, %c0_i32_0 : i32, i32
  }
  func.func @transform_4(%arg0: i32) -> (i32, i32) {
    %c0_i32 = arith.constant 0 : i32
    %c0_i32_0 = arith.constant 0 : i32
    %c0_i32_1 = arith.constant 0 : i32
    return %c0_i32, %c0_i32_0 : i32, i32
  }
  func.func @transform_5(%arg0: i32) -> (i32, i32) {
    %c0_i32 = arith.constant 0 : i32
    %c0_i32_0 = arith.constant 0 : i32
    return %arg0, %c0_i32 : i32, i32
  }
}

</mosaic_0001>

<llo_original>
// kernel: tpu_custom_call.1
$region0: #{tpu_custom_call.1}
  #allocation0 [shape = 'u32[]', space=smem, size = 0x4, offset = 0x4, fixed_abs, tag = 'smem constant byte address 0x4 - core index']
  #allocation1 [shape = 'u32[72,128]{1,0:T(1,128)}', space=vmem, size = 0x9000, scoped, tag = 'internal scratch']
  %s0 = inlined_call_operand.hbm [shape: f32[8,16], index: 0, kind: input, shape index: {}]
  %s1 = inlined_call_operand.hbm [shape: bf16[16,128], index: 1, kind: input, shape index: {}]
  %s2 = inlined_call_operand.vmem [shape: f32[1,128], index: 2, kind: input, shape index: {}]
  %s3 = inlined_call_operand.hbm [shape: bf16[128,128], index: 3, kind: input, shape index: {}]
  %s4 = inlined_call_operand.vmem [shape: f32[1,128], index: 4, kind: input, shape index: {}]
  %s5 = inlined_call_operand.hbm [shape: f32[8,128], index: 5, kind: output, shape index: {}]
  %s6 = sld [smem:[#allocation0]]
  $region42: #{tpu_custom_call.1} parent=0
    _
  %s8 = ssub.s32 1, %s6
  %s9 = scalar_select 0, %s8, %s6
  $region1: #{tpu_custom_call.1} parent=0
    #allocation2 [shape = 'u8[4096]{0}', space=vmem, size = 0x1000, scoped, tag = 'input window, operand 0, single buffered']
    #allocation3 [shape = 's32[1]{0}', space=sflag, size = 0x4, scoped, tag = 'scoped memory for tpu_custom_call.1']
    #allocation4 [shape = 's32[1]{0}', space=sflag, size = 0x4, scoped, tag = 'scoped memory for tpu_custom_call.1']
    #allocation5 [shape = 'u8[4096]{0}', space=vmem, size = 0x1000, scoped, tag = 'input window, operand 1, single buffered']
    #allocation6 [shape = 's32[1]{0}', space=sflag, size = 0x4, scoped, tag = 'scoped memory for tpu_custom_call.1']
    #allocation7 [shape = 'u8[32768]{0}', space=vmem, size = 0x8000, scoped, tag = 'input window, operand 3, single buffered']
    #allocation8 [shape = 'u8[4096]{0}', space=vmem, size = 0x1000, scoped, tag = 'output window, operand 0, single buffered']
    %10 = vsyncpa [#allocation3], 0
    %11 = vsyncpa [#allocation6], 0
    %12 = vsyncpa [#allocation4], 0
    // Predicated region
    $region2: #{tpu_custom_call.1} parent=1 // pred_check
      _
    $region3: #{tpu_custom_call.1} parent=1 // pred_check_branch
      %14 = sbr.rel (0) target = $region5
    $region4: #{tpu_custom_call.1} parent=1 // pred_region
      %16 = vsyncadd [#allocation3], 0
      %s18 = sshll.u32 %s0, 4
      %s19 = int_to_ptr.hbm [resolvable:$true] %s18
      %s20 = sshll.u32 [#allocation2], 4
      %s21 = int_to_ptr.vmem [resolvable:$true] %s20
      %23 = dma.hbm_to_vmem [thread:$0]  %s19, 128, %s21, [#allocation3]
    $region5: #{tpu_custom_call.1} parent=1 // pred_fallthru
      _
    // Predicated region
    $region6: #{tpu_custom_call.1} parent=1 // pred_check
      _
    $region7: #{tpu_custom_call.1} parent=1 // pred_check_branch
      %25 = sbr.rel (0) target = $region9
    $region8: #{tpu_custom_call.1} parent=1 // pred_region
      %27 = vsyncadd [#allocation6], 0
      %s28 = sshll.u32 %s1, 4
      %s29 = int_to_ptr.hbm [resolvable:$true] %s28
      %s30 = sshll.u32 [#allocation5], 4
      %s31 = int_to_ptr.vmem [resolvable:$true] %s30
      %36 = dma.hbm_to_vmem [thread:$0]  %s29, 128, %s31, [#allocation6], 64, 64, 4
    $region9: #{tpu_custom_call.1} parent=1 // pred_fallthru
      _
    // Predicated region
    $region10: #{tpu_custom_call.1} parent=1 // pred_check
      _
    $region11: #{tpu_custom_call.1} parent=1 // pred_check_branch
      %38 = sbr.rel (0) target = $region13
    $region12: #{tpu_custom_call.1} parent=1 // pred_region
      _
    $region13: #{tpu_custom_call.1} parent=1 // pred_fallthru
      _
    // Predicated region
    $region14: #{tpu_custom_call.1} parent=1 // pred_check
      _
    $region15: #{tpu_custom_call.1} parent=1 // pred_check_branch
      %40 = sbr.rel (0) target = $region17
    $region16: #{tpu_custom_call.1} parent=1 // pred_region
      %42 = vsyncadd [#allocation6], 0
      %s43 = sshll.u32 %s3, 4
      %s44 = int_to_ptr.hbm [resolvable:$true] %s43
      %s45 = sshll.u32 [#allocation7], 4
      %s46 = int_to_ptr.vmem [resolvable:$true] %s45
      %51 = dma.hbm_to_vmem [thread:$0]  %s44, 1024, %s46, [#allocation6], 64, 64, 4
    $region17: #{tpu_custom_call.1} parent=1 // pred_fallthru
      _
    // Predicated region
    $region18: #{tpu_custom_call.1} parent=1 // pred_check
      _
    $region19: #{tpu_custom_call.1} parent=1 // pred_check_branch
      %53 = sbr.rel (0) target = $region21
    $region20: #{tpu_custom_call.1} parent=1 // pred_region
      _
    $region21: #{tpu_custom_call.1} parent=1 // pred_fallthru
      _
    // Predicated region
    $region22: #{tpu_custom_call.1} parent=1 // pred_check
      _
    $region23: #{tpu_custom_call.1} parent=1 // pred_check_branch
      %55 = sbr.rel (0) target = $region25
    $region24: #{tpu_custom_call.1} parent=1 // pred_region
      %57 = dma.done [#allocation3], 128
    $region25: #{tpu_custom_call.1} parent=1 // pred_fallthru
      _
    // Predicated region
    $region26: #{tpu_custom_call.1} parent=1 // pred_check
      _
    $region27: #{tpu_custom_call.1} parent=1 // pred_check_branch
      %59 = sbr.rel (0) target = $region29
    $region28: #{tpu_custom_call.1} parent=1 // pred_region
      %61 = dma.done [#allocation6], 128
    $region29: #{tpu_custom_call.1} parent=1 // pred_fallthru
      _
    // Predicated region
    $region30: #{tpu_custom_call.1} parent=1 // pred_check
      _
    $region31: #{tpu_custom_call.1} parent=1 // pred_check_branch
      %63 = sbr.rel (0) target = $region33
    $region32: #{tpu_custom_call.1} parent=1 // pred_region
      %65 = dma.done [#allocation6], 1024
    $region33: #{tpu_custom_call.1} parent=1 // pred_fallthru
      _
    %v67 = vld [vmem:[#allocation2] sm:$0xff]
    %v68 = vpack.c.bf16 %v67, %v67
    %v69 = vld [vmem:[#allocation5] sm:$0xf]
    %v70 = vld [vmem:[#allocation5 + $0x4] sm:$0xf]
    %v71 = vld [vmem:[%s2] sm:$0x1]
    %v73 = vperm.slane %v71, 0
    %v77 = vunpack.c.l.b16 %v69
    %v78 = vunpack.c.l.b16 %v70
    %v79 = vpack.c.b16 %v78, %v77
    %vm81 = vcmask 130048
    %v83 = vsel %vm81, %v68, 0
    %85 = vmatpush.bf16.msra.mxu0 0
    %86 = vmatpush.bf16.msra.mxu0 0
    %87 = vmatpush.bf16.msra.mxu0 0
    %88 = vmatpush.bf16.msra.mxu0 0
    %89 = vmatpush.bf16.msra.mxu0 0
    %90 = vmatpush.bf16.msra.mxu0 0
    %91 = vmatpush.bf16.msra.mxu0 0
    %92 = vmatpush.bf16.msra.mxu0 %v79
    %93 = vmatmul.bf16.gmra.mxu0 %v83
    %v94 = vpop.f32.mrf.mxu0
    %v95 = vadd.f32 %v73, %v94
    %v96 = vpop.f32.mrf.mxu0
    %97 = vdwg.mxu0
    %v98 = vtanh.pop %v95
    %v99 = vpack.c.bf16 %v98, %v98
    %v100 = vld [vmem:[#allocation7] sm:$0xf]
    %v101 = vld [vmem:[#allocation7 + $0x4] sm:$0xf]
    %v102 = vld [vmem:[#allocation7 + $0x8] sm:$0xf]
    %v103 = vld [vmem:[#allocation7 + $0xc] sm:$0xf]
    %v104 = vld [vmem:[#allocation7 + $0x10] sm:$0xf]
    %v105 = vld [vmem:[#allocation7 + $0x14] sm:$0xf]
    %v106 = vld [vmem:[#allocation7 + $0x18] sm:$0xf]
    %v107 = vld [vmem:[#allocation7 + $0x1c] sm:$0xf]
    %v108 = vld [vmem:[#allocation7 + $0x20] sm:$0xf]
    %v109 = vld [vmem:[#allocation7 + $0x24] sm:$0xf]
    %v110 = vld [vmem:[#allocation7 + $0x28] sm:$0xf]
    %v111 = vld [vmem:[#allocation7 + $0x2c] sm:$0xf]
    %v112 = vld [vmem:[#allocation7 + $0x30] sm:$0xf]
    %v113 = vld [vmem:[#allocation7 + $0x34] sm:$0xf]
    %v114 = vld [vmem:[#allocation7 + $0x38] sm:$0xf]
    %v115 = vld [vmem:[#allocation7 + $0x3c] sm:$0xf]
    %v116 = vld [vmem:[%s4] sm:$0x1]
    %v118 = vperm.slane %v116, 0
    %v136 = vunpack.c.l.b16 %v100
    %v137 = vunpack.c.l.b16 %v101
    %v138 = vunpack.c.l.b16 %v102
    %v139 = vunpack.c.l.b16 %v103
    %v140 = vunpack.c.l.b16 %v104
    %v141 = vunpack.c.l.b16 %v105
    %v142 = vunpack.c.l.b16 %v106
    %v143 = vunpack.c.l.b16 %v107
    %v144 = vunpack.c.l.b16 %v108
    %v145 = vunpack.c.l.b16 %v109
    %v146 = vunpack.c.l.b16 %v110
    %v147 = vunpack.c.l.b16 %v111
    %v148 = vunpack.c.l.b16 %v112
    %v149 = vunpack.c.l.b16 %v113
    %v150 = vunpack.c.l.b16 %v114
    %v151 = vunpack.c.l.b16 %v115
    %v152 = vpack.c.b16 %v137, %v136
    %v153 = vpack.c.b16 %v139, %v138
    %v154 = vpack.c.b16 %v141, %v140
    %v155 = vpack.c.b16 %v143, %v142
    %v156 = vpack.c.b16 %v145, %v144
    %v157 = vpack.c.b16 %v147, %v146
    %v158 = vpack.c.b16 %v149, %v148
    %v159 = vpack.c.b16 %v151, %v150
    %168 = vmatpush.bf16.msra.mxu0 %v159
    %169 = vmatpush.bf16.msra.mxu0 %v158
    %170 = vmatpush.bf16.msra.mxu0 %v157
    %171 = vmatpush.bf16.msra.mxu0 %v156
    %172 = vmatpush.bf16.msra.mxu0 %v155
    %173 = vmatpush.bf16.msra.mxu0 %v154
    %174 = vmatpush.bf16.msra.mxu0 %v153
    %175 = vmatpush.bf16.msra.mxu0 %v152
    %176 = vmatmul.bf16.gmra.mxu0 %v99
    %v177 = vpop.f32.mrf.mxu0
    %v178 = vadd.f32 %v118, %v177
    %v179 = vpop.f32.mrf.mxu0
    %180 = vdwg.mxu0
    %181 = vst [vmem:[#allocation8] sm:$0xff] %v178
    // Predicated region
    $region34: #{tpu_custom_call.1} parent=1 // pred_check
      _
    $region35: #{tpu_custom_call.1} parent=1 // pred_check_branch
      %183 = sbr.rel (0) target = $region37
    $region36: #{tpu_custom_call.1} parent=1 // pred_region
      %185 = vsyncadd [#allocation4], 0
      %s187 = sshll.u32 [#allocation8], 4
      %s188 = int_to_ptr.vmem [resolvable:$true] %s187
      %s189 = sshll.u32 %s5, 4
      %s190 = int_to_ptr.hbm [resolvable:$true] %s189
      %192 = dma.vmem_to_hbm [thread:$0]  %s188, 128, %s190, [#allocation4]
    $region37: #{tpu_custom_call.1} parent=1 // pred_fallthru
      _
    // Predicated region
    $region38: #{tpu_custom_call.1} parent=1 // pred_check
      _
    $region39: #{tpu_custom_call.1} parent=1 // pred_check_branch
      %194 = sbr.rel (0) target = $region41
    $region40: #{tpu_custom_call.1} parent=1 // pred_region
      %196 = dma.done [#allocation4], 128
    $region41: #{tpu_custom_call.1} parent=1 // pred_fallthru
      _
    %197 = vsyncpa [#allocation3], 1
    %198 = vsyncpa [#allocation6], 1
    %199 = vsyncpa [#allocation4], 1

</llo_original>
